<compile_context>
chip_gen: v5e
topology: v5e:2x2
jax: 0.10.0
libtpu: 0.0.40
codegen_flags: <defaults>
</compile_context>

<pallas_src>
from functools import partial

import jax
import jax.numpy as jnp
from jax.experimental import pallas as pl
from jax.experimental.pallas import tpu as pltpu


# ---------------------------------------------------------------------------
# Kernels
# ---------------------------------------------------------------------------

def _mlp_slab(x_ref, w1_ref, b1_ref, w2_ref, b2_ref):
    """Shared body: fused-across-members 2-layer MLP.

    x_ref:  (B, D_in)
    w1_ref: (D_in, N*H)         (member-major concat of per-member W1)
    b1_ref: (1, N*H)
    w2_ref: (N*H, N*D_out)      (block-diagonal: member i's W2 on block (i,i))
    b2_ref: (1, N*D_out)
    returns (B, N*D_out) float32
    """
    x = x_ref[...]
    h = jnp.dot(x, w1_ref[...], preferred_element_type=jnp.float32)
    h = h + b1_ref[...].astype(jnp.float32)
    h = jnp.maximum(h, 0.0)
    y = jnp.dot(h.astype(w2_ref.dtype), w2_ref[...],
                preferred_element_type=jnp.float32)
    y = y + b2_ref[...].astype(jnp.float32)
    return y


def _ensemble_fwd_kernel(x_ref, w1_ref, b1_ref, w2_ref, b2_ref, o_ref):
    # o_ref: (B, N*D_out) — single lane-dense slab store.
    o_ref[...] = _mlp_slab(x_ref, w1_ref, b1_ref, w2_ref, b2_ref).astype(o_ref.dtype)


def _ensemble_mu_var_kernel(x_ref, w1_ref, b1_ref, w2_ref, b2_ref,
                            mu_ref, var_ref, *, n, d_out):
    # Fused mu/var over the ensemble axis: no (N,B,D_out) HBM materialization.
    y = _mlp_slab(x_ref, w1_ref, b1_ref, w2_ref, b2_ref)   # (B, N*D_out) f32
    acc = jnp.zeros(mu_ref.shape, jnp.float32)
    acc2 = jnp.zeros(mu_ref.shape, jnp.float32)
    for i in range(n):  # static Python loop, n is small
        yi = y[:, i * d_out:(i + 1) * d_out]
        acc = acc + yi
        acc2 = acc2 + yi * yi
    inv_n = 1.0 / n
    mu = acc * inv_n
    # Population variance (ddof=0) — matches np.var used by Ensemble.mu_var.
    var = jnp.maximum(acc2 * inv_n - mu * mu, 0.0)
    mu_ref[...] = mu.astype(mu_ref.dtype)
    var_ref[...] = var.astype(var_ref.dtype)


# ---------------------------------------------------------------------------
# Wrapper-side parameter packing (plain XLA, done once per call)
# ---------------------------------------------------------------------------

def _pack_params(w1, b1, w2, b2):
    n, d_in, hidden = w1.shape
    d_out = w2.shape[-1]
    # (N, D_in, H) -> (D_in, N*H), member-major along lanes.
    w1_flat = jnp.transpose(w1, (1, 0, 2)).reshape(d_in, n * hidden)
    b1_flat = b1.reshape(1, n * hidden)
    # Block-diagonal (N*H, N*D_out): zeros off-diagonal keep members independent.
    w2_block = jnp.zeros((n * hidden, n * d_out), dtype=w2.dtype)
    for i in range(n):
        w2_block = w2_block.at[i * hidden:(i + 1) * hidden,
                               i * d_out:(i + 1) * d_out].set(w2[i])
    b2_flat = b2.reshape(1, n * d_out)
    return w1_flat, b1_flat, w2_block, b2_flat


def _prepare_inputs(x, w1, b1, w2, b2, use_bf16_matmul):
    w1f, b1f, w2blk, b2f = _pack_params(w1, b1, w2, b2)
    x_in = x
    if use_bf16_matmul:
        # bf16 MXU operands (v6e/v7x peak), f32 accumulation inside the kernel.
        x_in = x.astype(jnp.bfloat16)
        w1f = w1f.astype(jnp.bfloat16)
        w2blk = w2blk.astype(jnp.bfloat16)
    return x_in, w1f, b1f, w2blk, b2f


def _cost_estimate(b, d_in, hidden, n, d_out, operands, out_elems):
    flops = 2 * b * d_in * (n * hidden) + 2 * b * (n * hidden) * (n * d_out)
    bytes_accessed = sum(int(a.size) * a.dtype.itemsize for a in operands)
    bytes_accessed += int(out_elems) * 4
    return pl.CostEstimate(flops=flops, transcendentals=0,
                           bytes_accessed=bytes_accessed)


_VMEM_SPEC = pl.BlockSpec(memory_space=pltpu.MemorySpace.VMEM)


# ---------------------------------------------------------------------------
# Public entry points
# ---------------------------------------------------------------------------

def ensemble_forward(x, w1, b1, w2, b2, *, use_bf16_matmul=False):
    """Pallas implementation of Ensemble.forward for an MLP base network.

    x:  (B, D_in)
    w1: (N, D_in, H), b1: (N, 1, H)
    w2: (N, H, D_out), b2: (N, 1, D_out)
    returns: (N, B, D_out)  == torch.stack([net_i(x) for i in range(N)])
    """
    n, d_in, hidden = w1.shape
    b = x.shape[0]
    d_out = w2.shape[-1]

    operands = _prepare_inputs(x, w1, b1, w2, b2, use_bf16_matmul)
    slab = pl.pallas_call(
        _ensemble_fwd_kernel,
        out_shape=jax.ShapeDtypeStruct((b, n * d_out), jnp.float32),
        in_specs=[_VMEM_SPEC] * 5,
        out_specs=_VMEM_SPEC,
        cost_estimate=_cost_estimate(b, d_in, hidden, n, d_out,
                                     operands, b * n * d_out),
    )(*operands)
    # (B, N*D_out) -> (N, B, D_out), matching torch.stack semantics.
    return jnp.transpose(slab.reshape(b, n, d_out), (1, 0, 2)).astype(x.dtype)


def ensemble_mu_var(x, w1, b1, w2, b2, *, use_bf16_matmul=False):
    """Fused equivalent of Ensemble.mu_var (mean / population variance over N)."""
    n, d_in, hidden = w1.shape
    b = x.shape[0]
    d_out = w2.shape[-1]

    operands = _prepare_inputs(x, w1, b1, w2, b2, use_bf16_matmul)
    mu, var = pl.pallas_call(
        partial(_ensemble_mu_var_kernel, n=n, d_out=d_out),
        out_shape=(jax.ShapeDtypeStruct((b, d_out), jnp.float32),
                   jax.ShapeDtypeStruct((b, d_out), jnp.float32)),
        in_specs=[_VMEM_SPEC] * 5,
        out_specs=(_VMEM_SPEC, _VMEM_SPEC),
        cost_estimate=_cost_estimate(b, d_in, hidden, n, d_out,
                                     operands, 2 * b * d_out),
    )(*operands)
    return mu, var


# ---------------------------------------------------------------------------
# Pure-JAX reference
# ---------------------------------------------------------------------------

def _reference_forward(x, w1, b1, w2, b2):
    outs = []
    for i in range(w1.shape[0]):
        h = jnp.maximum(x @ w1[i] + b1[i], 0.0)
        outs.append(h @ w2[i] + b2[i])
    return jnp.stack(outs, axis=0)


if __name__ == "__main__":
    # Small, module-consistent shapes: n=5 ensemble members, batch=8,
    # 32 input features, 32 hidden units, 8 outputs.
    N, B, D_IN, HIDDEN, D_OUT = 5, 8, 32, 32, 8

    key = jax.random.PRNGKey(0)
    kx, kw1, kb1, kw2, kb2 = jax.random.split(key, 5)

    x = jax.random.normal(kx, (B, D_IN), dtype=jnp.float32)
    w1 = jax.random.normal(kw1, (N, D_IN, HIDDEN), dtype=jnp.float32) * 0.1
    b1 = jax.random.normal(kb1, (N, 1, HIDDEN), dtype=jnp.float32) * 0.1
    w2 = jax.random.normal(kw2, (N, HIDDEN, D_OUT), dtype=jnp.float32) * 0.1
    b2 = jax.random.normal(kb2, (N, 1, D_OUT), dtype=jnp.float32) * 0.1

    ref = _reference_forward(x, w1, b1, w2, b2)

    # f32 forward — exact match expected.
    out = jax.block_until_ready(ensemble_forward(x, w1, b1, w2, b2))
    assert out.shape == (N, B, D_OUT), out.shape
    assert jnp.allclose(out, ref, atol=1e-5, rtol=1e-5), "forward mismatch vs reference"

    # Fused mu/var (population variance, ddof=0, matching np.var in the module).
    mu, var = jax.block_until_ready(ensemble_mu_var(x, w1, b1, w2, b2))
    assert mu.shape == (B, D_OUT) and var.shape == (B, D_OUT)
    assert jnp.allclose(mu, ref.mean(axis=0), atol=1e-4, rtol=1e-4), "mu mismatch"
    assert jnp.allclose(var, ref.var(axis=0), atol=1e-4, rtol=1e-4), "var mismatch"

    # bf16-operand path (v6e/v7x MXU peak), f32 accumulation — loose tolerance.
    out_bf16 = jax.block_until_ready(
        ensemble_forward(x, w1, b1, w2, b2, use_bf16_matmul=True))
    assert jnp.allclose(out_bf16, ref, atol=5e-2, rtol=5e-2), "bf16 forward mismatch"

    print("KERNEL_OK")
</pallas_src>

<mosaic_0001>
module attributes {stable_mosaic.version = 11 : i64} {
  func.func @_ensemble_fwd_kernel(%arg0: memref<8x32xf32, #tpu.memory_space<vmem>>, %arg1: memref<32x160xf32, #tpu.memory_space<vmem>>, %arg2: memref<1x160xf32, #tpu.memory_space<vmem>>, %arg3: memref<160x40xf32, #tpu.memory_space<vmem>>, %arg4: memref<1x40xf32, #tpu.memory_space<vmem>>, %arg5: memref<8x40xf32, #tpu.memory_space<vmem>>) attributes {dimension_semantics = [], scalar_prefetch = 0 : i64, scratch_operands = 0 : i64, tpu.core_type = #tpu.core_type<tc>} {
    %c0 = arith.constant 0 : index
    %c0_0 = arith.constant 0 : index
    %0 = vector.load %arg0[%c0, %c0_0] : memref<8x32xf32, #tpu.memory_space<vmem>>, vector<8x32xf32>
    %c0_1 = arith.constant 0 : index
    %c0_2 = arith.constant 0 : index
    %1 = vector.load %arg1[%c0_1, %c0_2] : memref<32x160xf32, #tpu.memory_space<vmem>>, vector<32x160xf32>
    %cst = arith.constant dense<0.000000e+00> : vector<8x160xf32>
    %2 = tpu.matmul %0, %1, %cst {dimension_numbers = #tpu.dot_dimension_numbers<[1], [0], [0], [1], [0, 0, 1, 1], [], []>} : vector<8x32xf32>, vector<32x160xf32>, vector<8x160xf32> -> vector<8x160xf32>
    %c0_3 = arith.constant 0 : index
    %c0_4 = arith.constant 0 : index
    %3 = vector.load %arg2[%c0_3, %c0_4] : memref<1x160xf32, #tpu.memory_space<vmem>>, vector<1x160xf32>
    %4 = vector.broadcast %3 : vector<1x160xf32> to vector<8x160xf32>
    %5 = arith.addf %2, %4 : vector<8x160xf32>
    %cst_5 = arith.constant 0.000000e+00 : f32
    %6 = vector.broadcast %cst_5 : f32 to vector<8x160xf32>
    %7 = arith.maximumf %5, %6 : vector<8x160xf32>
    %c0_6 = arith.constant 0 : index
    %c0_7 = arith.constant 0 : index
    %8 = vector.load %arg3[%c0_6, %c0_7] : memref<160x40xf32, #tpu.memory_space<vmem>>, vector<160x40xf32>
    %cst_8 = arith.constant dense<0.000000e+00> : vector<8x40xf32>
    %9 = tpu.matmul %7, %8, %cst_8 {dimension_numbers = #tpu.dot_dimension_numbers<[1], [0], [0], [1], [0, 0, 1, 1], [], []>} : vector<8x160xf32>, vector<160x40xf32>, vector<8x40xf32> -> vector<8x40xf32>
    %c0_9 = arith.constant 0 : index
    %c0_10 = arith.constant 0 : index
    %10 = vector.load %arg4[%c0_9, %c0_10] : memref<1x40xf32, #tpu.memory_space<vmem>>, vector<1x40xf32>
    %11 = vector.broadcast %10 : vector<1x40xf32> to vector<8x40xf32>
    %12 = arith.addf %9, %11 : vector<8x40xf32>
    %c0_11 = arith.constant 0 : index
    %c0_12 = arith.constant 0 : index
    %13 = vector.load %arg5[%c0_11, %c0_12] : memref<8x40xf32, #tpu.memory_space<vmem>>, vector<8x40xf32>
    tpu.vector_store %arg5[%c0_11, %c0_12], %12 {strides = array<i32>} : memref<8x40xf32, #tpu.memory_space<vmem>>, vector<8x40xf32>,
    return
  }
}

</mosaic_0001>

<llo_original>
// kernel: tpu_custom_call.1
$region0: #{tpu_custom_call.1}
  #allocation0 [shape = 'u32[]', space=smem, size = 0x4, offset = 0x4, fixed_abs, tag = 'smem constant byte address 0x4 - core index']
  #allocation1 [shape = 'u32[72,128]{1,0:T(1,128)}', space=vmem, size = 0x9000, scoped, tag = 'internal scratch']
  %s0 = inlined_call_operand.vmem [shape: f32[8,32], index: 0, kind: input, shape index: {}]
  %s1 = inlined_call_operand.vmem [shape: f32[32,160], index: 1, kind: input, shape index: {}]
  %s2 = inlined_call_operand.vmem [shape: f32[1,160], index: 2, kind: input, shape index: {}]
  %s3 = inlined_call_operand.vmem [shape: f32[160,40], index: 3, kind: input, shape index: {}]
  %s4 = inlined_call_operand.vmem [shape: f32[1,40], index: 4, kind: input, shape index: {}]
  %s5 = inlined_call_operand.hbm [shape: f32[8,40], index: 5, kind: output, shape index: {}]
  %s6 = sld [smem:[#allocation0]]
  $region30: #{tpu_custom_call.1} parent=0
    _
  %s8 = ssub.s32 1, %s6
  %s9 = scalar_select 0, %s8, %s6
  $region1: #{tpu_custom_call.1} parent=0
    #allocation2 [shape = 'u8[4096]{0}', space=vmem, size = 0x1000, scoped, tag = 'output window, operand 0, single buffered']
    #allocation3 [shape = 's32[1]{0}', space=sflag, size = 0x4, scoped, tag = 'scoped memory for tpu_custom_call.1']
    %10 = vsyncpa [#allocation3], 0
    // Predicated region
    $region2: #{tpu_custom_call.1} parent=1 // pred_check
      _
    $region3: #{tpu_custom_call.1} parent=1 // pred_check_branch
      %12 = sbr.rel (0) target = $region5
    $region4: #{tpu_custom_call.1} parent=1 // pred_region
      _
    $region5: #{tpu_custom_call.1} parent=1 // pred_fallthru
      _
    // Predicated region
    $region6: #{tpu_custom_call.1} parent=1 // pred_check
      _
    $region7: #{tpu_custom_call.1} parent=1 // pred_check_branch
      %14 = sbr.rel (0) target = $region9
    $region8: #{tpu_custom_call.1} parent=1 // pred_region
      _
    $region9: #{tpu_custom_call.1} parent=1 // pred_fallthru
      _
    // Predicated region
    $region10: #{tpu_custom_call.1} parent=1 // pred_check
      _
    $region11: #{tpu_custom_call.1} parent=1 // pred_check_branch
      %16 = sbr.rel (0) target = $region13
    $region12: #{tpu_custom_call.1} parent=1 // pred_region
      _
    $region13: #{tpu_custom_call.1} parent=1 // pred_fallthru
      _
    // Predicated region
    $region14: #{tpu_custom_call.1} parent=1 // pred_check
      _
    $region15: #{tpu_custom_call.1} parent=1 // pred_check_branch
      %18 = sbr.rel (0) target = $region17
    $region16: #{tpu_custom_call.1} parent=1 // pred_region
      _
    $region17: #{tpu_custom_call.1} parent=1 // pred_fallthru
      _
    // Predicated region
    $region18: #{tpu_custom_call.1} parent=1 // pred_check
      _
    $region19: #{tpu_custom_call.1} parent=1 // pred_check_branch
      %20 = sbr.rel (0) target = $region21
    $region20: #{tpu_custom_call.1} parent=1 // pred_region
      _
    $region21: #{tpu_custom_call.1} parent=1 // pred_fallthru
      _
    %v21 = vld [vmem:[%s0] sm:$0xff]
    %v22 = vld [vmem:[%s1] sm:$0xff]
    %v23 = vld [vmem:[%s1 + $0x8] sm:$0xff]
    %v24 = vld [vmem:[%s1 + $0x10] sm:$0xff]
    %v25 = vld [vmem:[%s1 + $0x18] sm:$0xff]
    %v26 = vld [vmem:[%s1 + $0x20] sm:$0xff]
    %v27 = vld [vmem:[%s1 + $0x28] sm:$0xff]
    %v28 = vld [vmem:[%s1 + $0x30] sm:$0xff]
    %v29 = vld [vmem:[%s1 + $0x38] sm:$0xff]
    %v30 = vld [vmem:[%s2] sm:$0x3]
    %v32 = vperm.slane %v30, 0
    %v33 = vperm.slane %v30, 1
    %vm36 = vcmask 261120
    %v38 = vsel %vm36, %v21, 0
    %40 = vmatpush.msra.mxu0 0.0
    %41 = vmatpush.msra.mxu0 0.0
    %42 = vmatpush.msra.mxu0 0.0
    %43 = vmatpush.msra.mxu0 0.0
    %44 = vmatpush.msra.mxu0 0.0
    %45 = vmatpush.msra.mxu0 0.0
    %46 = vmatpush.msra.mxu0 0.0
    %47 = vmatpush.msra.mxu0 0.0
    %48 = vmatpush.msra.mxu0 0.0
    %49 = vmatpush.msra.mxu0 0.0
    %50 = vmatpush.msra.mxu0 0.0
    %51 = vmatpush.msra.mxu0 0.0
    %52 = vmatpush.msra.mxu0 %v28
    %53 = vmatpush.msra.mxu0 %v26
    %54 = vmatpush.msra.mxu0 %v24
    %55 = vmatpush.msra.mxu0 %v22
    %56 = vmatmul.f32.gmra.mxu0 %v38
    %v57 = vpop.f32.mrf.mxu0
    %v58 = vadd.f32 %v32, %v57
    %59 = vdwg.mxu0
    %60 = vmatpush.msra.mxu0 0.0
    %61 = vmatpush.msra.mxu0 0.0
    %62 = vmatpush.msra.mxu0 0.0
    %63 = vmatpush.msra.mxu0 0.0
    %64 = vmatpush.msra.mxu0 0.0
    %65 = vmatpush.msra.mxu0 0.0
    %66 = vmatpush.msra.mxu0 0.0
    %67 = vmatpush.msra.mxu0 0.0
    %68 = vmatpush.msra.mxu0 0.0
    %69 = vmatpush.msra.mxu0 0.0
    %70 = vmatpush.msra.mxu0 0.0
    %71 = vmatpush.msra.mxu0 0.0
    %72 = vmatpush.msra.mxu0 %v29
    %73 = vmatpush.msra.mxu0 %v27
    %74 = vmatpush.msra.mxu0 %v25
    %75 = vmatpush.msra.mxu0 %v23
    %76 = vmatmul.f32.gmra.mxu0 %v38
    %v77 = vpop.f32.mrf.mxu0
    %v78 = vadd.f32 %v33, %v77
    %79 = vdwg.mxu0
    %v80 = vmax.f32 %v58, 0.0
    %v81 = vmax.f32 %v78, 0.0
    %v82 = vld [vmem:[%s3] sm:$0xff]
    %v83 = vld [vmem:[%s3 + $0x8] sm:$0xff]
    %v84 = vld [vmem:[%s3 + $0x10] sm:$0xff]
    %v85 = vld [vmem:[%s3 + $0x18] sm:$0xff]
    %v86 = vld [vmem:[%s3 + $0x20] sm:$0xff]
    %v87 = vld [vmem:[%s3 + $0x28] sm:$0xff]
    %v88 = vld [vmem:[%s3 + $0x30] sm:$0xff]
    %v89 = vld [vmem:[%s3 + $0x38] sm:$0xff]
    %v90 = vld [vmem:[%s3 + $0x40] sm:$0xff]
    %v91 = vld [vmem:[%s3 + $0x48] sm:$0xff]
    %v92 = vld [vmem:[%s3 + $0x50] sm:$0xff]
    %v93 = vld [vmem:[%s3 + $0x58] sm:$0xff]
    %v94 = vld [vmem:[%s3 + $0x60] sm:$0xff]
    %v95 = vld [vmem:[%s3 + $0x68] sm:$0xff]
    %v96 = vld [vmem:[%s3 + $0x70] sm:$0xff]
    %v97 = vld [vmem:[%s3 + $0x78] sm:$0xff]
    %v98 = vld [vmem:[%s3 + $0x80] sm:$0xff]
    %v99 = vld [vmem:[%s3 + $0x88] sm:$0xff]
    %v100 = vld [vmem:[%s3 + $0x90] sm:$0xff]
    %v101 = vld [vmem:[%s3 + $0x98] sm:$0xff]
    %v102 = vld [vmem:[%s4] sm:$0x1]
    %v104 = vperm.slane %v102, 0
    %v107 = vsel %vm36, %v81, 0
    %109 = vmatpush.msra.mxu0 %v97
    %110 = vmatpush.msra.mxu0 %v96
    %111 = vmatpush.msra.mxu0 %v95
    %112 = vmatpush.msra.mxu0 %v94
    %113 = vmatpush.msra.mxu0 %v93
    %114 = vmatpush.msra.mxu0 %v92
    %115 = vmatpush.msra.mxu0 %v91
    %116 = vmatpush.msra.mxu0 %v90
    %117 = vmatpush.msra.mxu0 %v89
    %118 = vmatpush.msra.mxu0 %v88
    %119 = vmatpush.msra.mxu0 %v87
    %120 = vmatpush.msra.mxu0 %v86
    %121 = vmatpush.msra.mxu0 %v85
    %122 = vmatpush.msra.mxu0 %v84
    %123 = vmatpush.msra.mxu0 %v83
    %124 = vmatpush.msra.mxu0 %v82
    %125 = vmatmul.f32.gmra.mxu0 %v80
    %v126 = vpop.f32.mrf.mxu0
    %v127 = vadd.f32 %v104, %v126
    %128 = vdwg.mxu0
    %129 = vmatpush.msra.mxu0 0.0
    %130 = vmatpush.msra.mxu0 0.0
    %131 = vmatpush.msra.mxu0 0.0
    %132 = vmatpush.msra.mxu0 0.0
    %133 = vmatpush.msra.mxu0 0.0
    %134 = vmatpush.msra.mxu0 0.0
    %135 = vmatpush.msra.mxu0 0.0
    %136 = vmatpush.msra.mxu0 0.0
    %137 = vmatpush.msra.mxu0 0.0
    %138 = vmatpush.msra.mxu0 0.0
    %139 = vmatpush.msra.mxu0 0.0
    %140 = vmatpush.msra.mxu0 0.0
    %141 = vmatpush.msra.mxu0 %v101
    %142 = vmatpush.msra.mxu0 %v100
    %143 = vmatpush.msra.mxu0 %v99
    %144 = vmatpush.msra.mxu0 %v98
    %145 = vmatmul.f32.gmra.mxu0 %v107
    %v146 = vpop.f32.mrf.mxu0
    %v147 = vadd.f32 %v127, %v146
    %148 = vdwg.mxu0
    %vm149 = vcmask 326656
    %150 = vst.msk [vmem:[#allocation2] sm:$0xff] %vm149, %v147
    // Predicated region
    $region22: #{tpu_custom_call.1} parent=1 // pred_check
      _
    $region23: #{tpu_custom_call.1} parent=1 // pred_check_branch
      %152 = sbr.rel (0) target = $region25
    $region24: #{tpu_custom_call.1} parent=1 // pred_region
      %154 = vsyncadd [#allocation3], 0
      %s156 = sshll.u32 [#allocation2], 4
      %s157 = int_to_ptr.vmem [resolvable:$true] %s156
      %s158 = sshll.u32 %s5, 4
      %s159 = int_to_ptr.hbm [resolvable:$true] %s158
      %161 = dma.vmem_to_hbm [thread:$0]  %s157, 128, %s159, [#allocation3]
    $region25: #{tpu_custom_call.1} parent=1 // pred_fallthru
      _
    // Predicated region
    $region26: #{tpu_custom_call.1} parent=1 // pred_check
      _
    $region27: #{tpu_custom_call.1} parent=1 // pred_check_branch
      %163 = sbr.rel (0) target = $region29
    $region28: #{tpu_custom_call.1} parent=1 // pred_region
      %165 = dma.done [#allocation3], 128
    $region29: #{tpu_custom_call.1} parent=1 // pred_fallthru
      _
    %166 = vsyncpa [#allocation3], 1

</llo_original>
